<compile_context>
chip_gen: v6e
topology: v6e:2x2x1
jax: 0.10.0
libtpu: 0.0.40
codegen_flags: <defaults>
</compile_context>

<pallas_src>
import jax
import jax.numpy as jnp
from jax.experimental import pallas as pl
from jax.experimental.pallas import tpu as pltpu


# ---------------- glue: sampling & grouping (plain JAX) ----------------

def square_distance(src, dst):
    """src: [B,N,C], dst: [B,M,C] -> [B,N,M] squared distances."""
    dist = -2.0 * jnp.matmul(src, jnp.swapaxes(dst, 1, 2))
    dist = dist + jnp.sum(src ** 2, -1)[..., None]
    dist = dist + jnp.sum(dst ** 2, -1)[:, None, :]
    return dist


def farthest_point_sample(xyz, npoint):
    """xyz: [B,N,3] -> indices [B,npoint]."""
    # TODO(synk): torch seeds `farthest` with randint; we use index 0 deterministically.
    bs, n_pts, _ = xyz.shape
    centroids = jnp.zeros((bs, npoint), dtype=jnp.int32)
    distance = jnp.full((bs, n_pts), 1e10, dtype=jnp.float32)
    farthest = jnp.zeros((bs,), dtype=jnp.int32)

    def body(i, carry):
        centroids, distance, farthest = carry
        centroids = centroids.at[:, i].set(farthest)
        centroid = jnp.take_along_axis(xyz, farthest[:, None, None], axis=1)  # [B,1,3]
        dist = jnp.sum((xyz - centroid) ** 2, -1)
        distance = jnp.minimum(distance, dist)
        farthest = jnp.argmax(distance, axis=-1).astype(jnp.int32)
        return centroids, distance, farthest

    centroids, _, _ = jax.lax.fori_loop(
        0, npoint, body, (centroids, distance, farthest))
    return centroids


def index_points(points, idx):
    """points: [B,N,C], idx: [B,...] int -> [B,...,C]."""
    bs = points.shape[0]
    c = points.shape[-1]
    idx_flat = idx.reshape(bs, -1)
    out = jnp.take_along_axis(points, idx_flat[..., None], axis=1)
    return out.reshape(idx.shape + (c,))


def query_ball_point(radius, nsample, xyz, new_xyz):
    """xyz: [B,N,3], new_xyz: [B,S,3] -> group idx [B,S,nsample]."""
    bs, n, _ = xyz.shape
    s = new_xyz.shape[1]
    group_idx = jnp.broadcast_to(jnp.arange(n, dtype=jnp.int32), (bs, s, n))
    sqrdists = square_distance(new_xyz, xyz)
    group_idx = jnp.where(sqrdists > radius ** 2, n, group_idx)
    group_idx = jnp.sort(group_idx, axis=-1)[:, :, :nsample]
    group_first = jnp.broadcast_to(group_idx[:, :, :1], group_idx.shape)
    group_idx = jnp.where(group_idx == n, group_first, group_idx)
    return group_idx


def sample_and_group(npoint, radius, nsample, xyz, points):
    """xyz: [B,N,3], points: [B,N,D] -> ([B,S,3], [B,S,K,3+D])."""
    bs, _, channels = xyz.shape
    fps_idx = farthest_point_sample(xyz, npoint)
    new_xyz = index_points(xyz, fps_idx)                       # [B,S,3]
    idx = query_ball_point(radius, nsample, xyz, new_xyz)      # [B,S,K]
    grouped_xyz = index_points(xyz, idx)                       # [B,S,K,3]
    grouped_xyz_norm = grouped_xyz - new_xyz.reshape(bs, npoint, 1, channels)
    if points is not None:
        grouped_points = index_points(points, idx)             # [B,S,K,D]
        new_points = jnp.concatenate([grouped_xyz_norm, grouped_points], axis=-1)
    else:
        new_points = grouped_xyz_norm
    return new_xyz, new_points


def sample_and_group_all(xyz, points):
    bs, n_pts, channels = xyz.shape
    new_xyz = jnp.zeros((bs, 1, channels), xyz.dtype)
    grouped_xyz = xyz.reshape(bs, 1, n_pts, channels)
    if points is not None:
        new_points = jnp.concatenate(
            [grouped_xyz, points.reshape(bs, 1, n_pts, -1)], axis=-1)
    else:
        new_points = grouped_xyz
    return new_xyz, new_points


# ---------------- tiling helpers ----------------

def _round_up(x, m):
    return ((x + m - 1) // m) * m


def _tpu_vmem_capacity_bytes():
    """Physical per-core VMEM; conservative 64 MiB default if undetectable."""
    cap = 64 << 20
    try:
        c = int(getattr(pltpu.get_tpu_info(), "vmem_capacity_bytes", 0))
        if c > 0:
            cap = c
    except Exception:
        pass
    return cap


def _epilogue_dtype(compute_dtype):
    """bf16 epilogue on bf16-VPU parts (v6e/v7x); f32 on v5-class chips."""
    try:
        ver = str(getattr(pltpu.get_tpu_info(), "chip_version", "")).lower()
        if "5" in ver:          # v5e/v5p VPU has no bf16 path
            return jnp.float32
    except Exception:
        pass
    return compute_dtype


def _choose_group_tile(g, k, cin_aug, aug_widths, cout_pad, gt_target, budget):
    """Pick GT (groups per grid step): multiple of 8, VMEM-budget limited,
    preferring an exact divisor of G and >= 2 grid steps."""
    widest = max([cin_aug] + list(aug_widths))
    bytes_per_group = (
        2 * k * cin_aug * 2          # double-buffered bf16 input tile
        + 2 * cout_pad * 4           # double-buffered f32 output tile
        + 8 * k * widest)            # live f32 acc + bf16 activations in-kernel
    gt = int(budget // max(bytes_per_group, 1))
    gt = min(gt, int(gt_target))
    gt = max(8, (gt // 8) * 8)                 # sublane-aligned output tile
    gt = min(gt, _round_up(max(g, 1), 8))      # don't over-pad tiny problems
    if g > 8:
        # keep >= 2 grid steps so "parallel" can use both v7x TensorCores
        gt = min(gt, max(8, _round_up(-(-g // 2), 8)))
    if g % 8 == 0 and g % gt != 0:
        # prefer a tile that divides G exactly -> no host-side pad pass
        for cand in range(gt, max(8, gt // 4) - 1, -8):
            if g % cand == 0:
                gt = cand
                break
    return gt


# ------- Pallas kernel: fused (1x1 conv with folded BN + shift, ReLU)* + max over K

def _make_mlp_kernel(num_layers, gt, k, compute_dtype, epilogue_dtype):
    def kernel(x_ref, *refs):
        w_refs = refs[:num_layers]
        out_ref = refs[num_layers]
        h = x_ref[...]                                    # (gt*k, cin_aug), bf16
        for layer in range(num_layers - 1):
            acc = jnp.dot(h, w_refs[layer][...],
                          preferred_element_type=jnp.float32)
            # Shift is folded into the matmul via the carried ones column, so
            # the inter-layer epilogue is a single ReLU (+ cast for the MXU).
            act = jnp.maximum(acc.astype(epilogue_dtype), 0.0)
            h = act.astype(compute_dtype)
        acc = jnp.dot(h, w_refs[num_layers - 1][...],
                      preferred_element_type=jnp.float32)  # (gt*k, cout_pad) f32
        # K-max on the raw accumulator first (ReLU/shift commute with max), so
        # the last-layer epilogue touches only (gt, cout_pad) elements.
        m = jnp.max(acc.reshape(gt, k, acc.shape[-1]), axis=1)
        out_ref[...] = jnp.maximum(m, 0.0)
    return kernel


def _grouped_mlp_max_single(x, params, g, cin, cout_pad, cout_last, num_layers,
                            compute_dtype, epilogue_dtype, gt_target, budget,
                            vmem_limit, aug_widths):
    """x: [G, Kc, Cin] f32; params: padded bf16 augmented weights."""
    k = x.shape[1]
    cin_aug = cin + 1
    gt = _choose_group_tile(g, k, cin_aug, aug_widths, cout_pad, gt_target, budget)
    g_pad = _round_up(g, gt)

    # Append the constant-1 channel that carries the folded shift through every
    # matmul; cast to the MXU compute dtype in the same pass; pre-flatten so
    # the kernel never reshapes its bf16 input.
    ones = jnp.ones((g, k, 1), compute_dtype)
    x2d = jnp.concatenate([x.astype(compute_dtype), ones], axis=-1)
    x2d = x2d.reshape(g * k, cin_aug)
    if g_pad != g:   # rare: gt is chosen to divide G whenever possible
        x2d = jnp.pad(x2d, ((0, (g_pad - g) * k), (0, 0)))

    kernel = _make_mlp_kernel(num_layers, gt, k, compute_dtype, epilogue_dtype)

    def run(single_buffer_params):
        in_specs = [pl.BlockSpec((gt * k, cin_aug), lambda i: (i, 0))]
        for p in params:
            if single_buffer_params:
                # grid-invariant operands: no need to double-buffer them
                in_specs.append(pl.BlockSpec(p.shape, lambda i: (0, 0),
                                             pipeline_mode=pl.Buffered(1)))
            else:
                in_specs.append(pl.BlockSpec(p.shape, lambda i: (0, 0)))
        return pl.pallas_call(
            kernel,
            grid=(g_pad // gt,),
            in_specs=in_specs,
            out_specs=pl.BlockSpec((gt, cout_pad), lambda i: (i, 0)),
            out_shape=jax.ShapeDtypeStruct((g_pad, cout_pad), jnp.float32),
            compiler_params=pltpu.CompilerParams(
                dimension_semantics=("parallel",),   # sharded across v7x's 2 TCs
                vmem_limit_bytes=vmem_limit),
        )(x2d, *params)

    try:
        out = jax.block_until_ready(run(True))
    except Exception:
        # Fallback if this lowering rejects single-buffered invariant operands.
        out = run(False)
    return out[:g, :cout_last]


def grouped_mlp_max(x, aug_weights, *, compute_dtype=jnp.bfloat16, gt_target=512):
    """x: [G, K, Cin] f32.  aug_weights: per-layer f32 [Cin_l+1, Cout_l(+1)]
    with BN scale folded into the top rows and the shift in the bottom row
    (intermediate layers carry a pass-through ones column).
    Returns [G, Cout_last] f32 = ReLU-MLP over channels, max-pooled over K."""
    g, k, cin = x.shape
    num_layers = len(aug_weights)
    cout_last = aug_weights[-1].shape[1]
    cout_pad = _round_up(cout_last, 128)
    epilogue_dtype = _epilogue_dtype(compute_dtype)

    cap = _tpu_vmem_capacity_bytes()
    budget = max(8 << 20, (cap * 2) // 5)            # per-step working-set budget
    vmem_limit = min((cap * 3) // 4, 112 << 20)      # > default scoped limit

    # Prepare params: bf16 cast; last-layer cols zero-padded to a lane-dense
    # multiple of 128 (padded cols give max(0)=0 -> ReLU 0 -> sliced off).
    params = []
    for li, w in enumerate(aug_weights):
        w = jnp.asarray(w, jnp.float32)
        if li == num_layers - 1 and cout_pad != cout_last:
            w = jnp.pad(w, ((0, 0), (0, cout_pad - cout_last)))
        params.append(w.astype(compute_dtype))
    aug_widths = [p.shape[1] for p in params]
    widest = max([cin + 1] + aug_widths)

    # K-chunking guard (group_all / huge nsample): the MLP is per-point, so
    # max over K commutes with chunking and results combine with jnp.maximum.
    k_chunk = max(8, int(budget // (64 * widest)))
    if k > k_chunk:
        out = None
        for start in range(0, k, k_chunk):
            part = _grouped_mlp_max_single(
                x[:, start:start + k_chunk], params, g, cin, cout_pad, cout_last,
                num_layers, compute_dtype, epilogue_dtype, gt_target, budget,
                vmem_limit, aug_widths)
            out = part if out is None else jnp.maximum(out, part)
        return out
    return _grouped_mlp_max_single(
        x, params, g, cin, cout_pad, cout_last, num_layers, compute_dtype,
        epilogue_dtype, gt_target, budget, vmem_limit, aug_widths)


# ---------------- Module wrapper ----------------

class PointNetSetAbstractionPallas:
    def __init__(self, npoint, radius, nsample, in_channel, mlp, group_all, key,
                 compute_dtype=jnp.bfloat16):
        self.npoint = npoint
        self.radius = radius
        self.nsample = nsample
        self.group_all = group_all
        self.compute_dtype = compute_dtype
        # Conv2d(Cin, Cout, 1) + BatchNorm2d (eval mode, default running stats)
        # + ReLU, with BN scale folded into the conv weight and the shift
        # folded into an augmented bias row consumed by a carried constant-1
        # activation column -> the kernel epilogue is ReLU-only.
        # TODO(synk): training-mode batch-statistic BN not implemented.
        eps = 1e-5
        last = in_channel
        num_layers = len(mlp)
        self.aug_weights = []
        for li, out_ch in enumerate(mlp):
            key, kw, kb = jax.random.split(key, 3)
            bound = 1.0 / (last ** 0.5)
            # Conv2d(last, out_ch, 1): weight [out, in, 1, 1], bias [out]
            w = jax.random.uniform(kw, (out_ch, last, 1, 1), jnp.float32, -bound, bound)
            b = jax.random.uniform(kb, (out_ch,), jnp.float32, -bound, bound)
            gamma = jnp.ones((out_ch,), jnp.float32)
            beta = jnp.zeros((out_ch,), jnp.float32)
            mean = jnp.zeros((out_ch,), jnp.float32)
            var = jnp.ones((out_ch,), jnp.float32)
            scale = gamma / jnp.sqrt(var + eps)
            shift = beta + (b - mean) * scale
            w_mat = w[:, :, 0, 0].T * scale[None, :]                  # [Cin, Cout]
            if li < num_layers - 1:
                # [ W  0 ]
                # [ s  1 ]  -> output carries a constant-1 column for the next layer
                top = jnp.concatenate([w_mat, jnp.zeros((last, 1), jnp.float32)], 1)
                bot = jnp.concatenate([shift[None, :], jnp.ones((1, 1), jnp.float32)], 1)
                w_aug = jnp.concatenate([top, bot], 0)                # [Cin+1, Cout+1]
            else:
                w_aug = jnp.concatenate([w_mat, shift[None, :]], 0)   # [Cin+1, Cout]
            self.aug_weights.append(w_aug)
            last = out_ch

    def __call__(self, coordinates, features):
        """coordinates: [B, 3, N], features: [B, D, N] ->
        (new_xyz [B, 3, S], new_features [B, C_last, S])."""
        xyz = jnp.transpose(coordinates, (0, 2, 1))
        points = (jnp.transpose(features, (0, 2, 1))
                  if features is not None else None)
        if self.group_all:
            new_xyz, new_points = sample_and_group_all(xyz, points)
        else:
            new_xyz, new_points = sample_and_group(
                self.npoint, self.radius, self.nsample, xyz, points)
        b, s, k, cin = new_points.shape
        x = new_points.reshape(b * s, k, cin)
        feat = grouped_mlp_max(x, self.aug_weights,
                               compute_dtype=self.compute_dtype)   # [B*S, Cout]
        feat = feat.reshape(b, s, -1).transpose(0, 2, 1)            # [B, Cout, S]
        new_xyz = new_xyz.transpose(0, 2, 1)                        # [B, 3, S]
        return new_xyz, feat


# ---------------- demo / check ----------------

if __name__ == "__main__":
    key = jax.random.PRNGKey(0)
    k_xyz, k_feat, k_param = jax.random.split(key, 3)

    B, N, D = 2, 32, 4
    npoint, radius, nsample = 8, 0.4, 8
    mlp = [16, 32]
    in_channel = 3 + D

    coords = jax.random.uniform(k_xyz, (B, 3, N), jnp.float32)   # [B, C=3, N]
    feats = jax.random.normal(k_feat, (B, D, N), jnp.float32)    # [B, D,   N]

    module = PointNetSetAbstractionPallas(
        npoint, radius, nsample, in_channel, mlp, group_all=False, key=k_param)

    new_xyz, new_feat = module(coords, feats)
    new_xyz, new_feat = jax.block_until_ready((new_xyz, new_feat))

    assert new_xyz.shape == (B, 3, npoint)
    assert new_feat.shape == (B, mlp[-1], npoint)

    # Pure-JAX reference for the fused MLP + K-max hot path (same grouping,
    # same folded/augmented bf16 weights, f32 MXU accumulation).
    xyz_t = jnp.transpose(coords, (0, 2, 1))
    pts_t = jnp.transpose(feats, (0, 2, 1))
    _, grp = sample_and_group(npoint, radius, nsample, xyz_t, pts_t)
    h = jnp.concatenate(
        [grp, jnp.ones(grp.shape[:-1] + (1,), grp.dtype)], axis=-1
    ).astype(module.compute_dtype)
    num_layers = len(module.aug_weights)
    ref_feat = None
    for li, w in enumerate(module.aug_weights):
        acc = jnp.einsum('bskc,cd->bskd', h, w.astype(module.compute_dtype),
                         preferred_element_type=jnp.float32)
        if li < num_layers - 1:
            h = jnp.maximum(acc, 0.0).astype(module.compute_dtype)
        else:
            ref_feat = jnp.maximum(jnp.max(acc, axis=2), 0.0)        # [B, S, Cout]
    ref_feat = ref_feat.transpose(0, 2, 1)                           # [B, Cout, S]
    assert jnp.allclose(ref_feat, new_feat, atol=2e-3, rtol=2e-3), (
        "Pallas MLP output mismatch vs reference")

    print("KERNEL_OK")
</pallas_src>

<mosaic_0001>
module attributes {stable_mosaic.version = 11 : i64} {
  func.func @kernel(%arg0: i32, %arg1: memref<64x8xbf16, #tpu.memory_space<vmem>>, %arg2: memref<8x17xbf16, #tpu.memory_space<vmem>>, %arg3: memref<17x128xbf16, #tpu.memory_space<vmem>>, %arg4: memref<8x128xf32, #tpu.memory_space<vmem>>) attributes {dimension_semantics = [#tpu.dimension_semantics<parallel>], iteration_bounds = array<i64: 2>, scalar_prefetch = 0 : i64, scratch_operands = 0 : i64, tpu.core_type = #tpu.core_type<tc>, window_params = [{transform_indices = @transform_0, window_bounds = array<i64: 64, 8>}, {pipeline_mode = #tpu.pipeline_mode<synchronous>, transform_indices = @transform_1, window_bounds = array<i64: 8, 17>}, {pipeline_mode = #tpu.pipeline_mode<synchronous>, transform_indices = @transform_2, window_bounds = array<i64: 17, 128>}, {transform_indices = @transform_3, window_bounds = array<i64: 8, 128>}]} {
    %c0 = arith.constant 0 : index
    %c0_0 = arith.constant 0 : index
    %0 = vector.load %arg1[%c0, %c0_0] : memref<64x8xbf16, #tpu.memory_space<vmem>>, vector<64x8xbf16>
    %c0_1 = arith.constant 0 : index
    %c0_2 = arith.constant 0 : index
    %1 = vector.load %arg2[%c0_1, %c0_2] : memref<8x17xbf16, #tpu.memory_space<vmem>>, vector<8x17xbf16>
    %cst = arith.constant dense<0.000000e+00> : vector<64x17xf32>
    %2 = tpu.matmul %0, %1, %cst {dimension_numbers = #tpu.dot_dimension_numbers<[1], [0], [0], [1], [0, 0, 1, 1], [], []>} : vector<64x8xbf16>, vector<8x17xbf16>, vector<64x17xf32> -> vector<64x17xf32>
    %3 = arith.truncf %2 : vector<64x17xf32> to vector<64x17xbf16>
    %cst_3 = arith.constant 0.000000e+00 : bf16
    %4 = vector.broadcast %cst_3 : bf16 to vector<64x17xbf16>
    %5 = arith.maximumf %3, %4 : vector<64x17xbf16>
    %c0_4 = arith.constant 0 : index
    %c0_5 = arith.constant 0 : index
    %6 = vector.load %arg3[%c0_4, %c0_5] : memref<17x128xbf16, #tpu.memory_space<vmem>>, vector<17x128xbf16>
    %cst_6 = arith.constant dense<0.000000e+00> : vector<64x128xf32>
    %7 = tpu.matmul %5, %6, %cst_6 {dimension_numbers = #tpu.dot_dimension_numbers<[1], [0], [0], [1], [0, 0, 1, 1], [], []>} : vector<64x17xbf16>, vector<17x128xbf16>, vector<64x128xf32> -> vector<64x128xf32>
    %8 = vector.shape_cast %7 : vector<64x128xf32> to vector<8x8x128xf32>
    %cst_7 = arith.constant dense<0xFF800000> : vector<8x128xf32>
    %9 = vector.multi_reduction <maximumf>, %8, %cst_7 [1] : vector<8x8x128xf32> to vector<8x128xf32>
    %cst_8 = arith.constant 0.000000e+00 : f32
    %10 = vector.broadcast %cst_8 : f32 to vector<8x128xf32>
    %11 = arith.maximumf %9, %10 : vector<8x128xf32>
    %c0_9 = arith.constant 0 : index
    %c0_10 = arith.constant 0 : index
    %12 = vector.load %arg4[%c0_9, %c0_10] : memref<8x128xf32, #tpu.memory_space<vmem>>, vector<8x128xf32>
    tpu.vector_store %arg4[%c0_9, %c0_10], %11 {strides = array<i32>} : memref<8x128xf32, #tpu.memory_space<vmem>>, vector<8x128xf32>,
    return
  }
  func.func @transform_0(%arg0: i32) -> (i32, i32) {
    %c0_i32 = arith.constant 0 : i32
    %c0_i32_0 = arith.constant 0 : i32
    return %arg0, %c0_i32 : i32, i32
  }
  func.func @transform_1(%arg0: i32) -> (i32, i32) {
    %c0_i32 = arith.constant 0 : i32
    %c0_i32_0 = arith.constant 0 : i32
    %c0_i32_1 = arith.constant 0 : i32
    return %c0_i32, %c0_i32_0 : i32, i32
  }
  func.func @transform_2(%arg0: i32) -> (i32, i32) {
    %c0_i32 = arith.constant 0 : i32
    %c0_i32_0 = arith.constant 0 : i32
    %c0_i32_1 = arith.constant 0 : i32
    return %c0_i32, %c0_i32_0 : i32, i32
  }
  func.func @transform_3(%arg0: i32) -> (i32, i32) {
    %c0_i32 = arith.constant 0 : i32
    %c0_i32_0 = arith.constant 0 : i32
    return %arg0, %c0_i32 : i32, i32
  }
}

module attributes {stable_mosaic.version = 11 : i64} {
  func.func @kernel(%arg0: i32, %arg1: memref<64x8xbf16, #tpu.memory_space<vmem>>, %arg2: memref<8x17xbf16, #tpu.memory_space<vmem>>, %arg3: memref<17x128xbf16, #tpu.memory_space<vmem>>, %arg4: memref<8x128xf32, #tpu.memory_space<vmem>>) attributes {dimension_semantics = [#tpu.dimension_semantics<parallel>], iteration_bounds = array<i64: 2>, scalar_prefetch = 0 : i64, scratch_operands = 0 : i64, tpu.core_type = #tpu.core_type<tc>, window_params = [{transform_indices = @transform_0, window_bounds = array<i64: 64, 8>}, {pipeline_mode = #tpu.pipeline_mode<synchronous>, transform_indices = @transform_1, window_bounds = array<i64: 8, 17>}, {pipeline_mode = #tpu.pipeline_mode<synchronous>, transform_indices = @transform_2, window_bounds = array<i64: 17, 128>}, {transform_indices = @transform_3, window_bounds = array<i64: 8, 128>}]} {
    %c0 = arith.constant 0 : index
    %c0_0 = arith.constant 0 : index
    %0 = vector.load %arg1[%c0, %c0_0] : memref<64x8xbf16, #tpu.memory_space<vmem>>, vector<64x8xbf16>
    %c0_1 = arith.constant 0 : index
    %c0_2 = arith.constant 0 : index
    %1 = vector.load %arg2[%c0_1, %c0_2] : memref<8x17xbf16, #tpu.memory_space<vmem>>, vector<8x17xbf16>
    %cst = arith.constant dense<0.000000e+00> : vector<64x17xf32>
    %2 = tpu.matmul %0, %1, %cst {dimension_numbers = #tpu.dot_dimension_numbers<[1], [0], [0], [1], [0, 0, 1, 1], [], []>} : vector<64x8xbf16>, vector<8x17xbf16>, vector<64x17xf32> -> vector<64x17xf32>
    %3 = arith.truncf %2 : vector<64x17xf32> to vector<64x17xbf16>
    %cst_3 = arith.constant 0.000000e+00 : bf16
    %4 = vector.broadcast %cst_3 : bf16 to vector<64x17xbf16>
    %5 = arith.maximumf %3, %4 : vector<64x17xbf16>
    %c0_4 = arith.constant 0 : index
    %c0_5 = arith.constant 0 : index
    %6 = vector.load %arg3[%c0_4, %c0_5] : memref<17x128xbf16, #tpu.memory_space<vmem>>, vector<17x128xbf16>
    %cst_6 = arith.constant dense<0.000000e+00> : vector<64x128xf32>
    %7 = tpu.matmul %5, %6, %cst_6 {dimension_numbers = #tpu.dot_dimension_numbers<[1], [0], [0], [1], [0, 0, 1, 1], [], []>} : vector<64x17xbf16>, vector<17x128xbf16>, vector<64x128xf32> -> vector<64x128xf32>
    %8 = vector.shape_cast %7 : vector<64x128xf32> to vector<8x8x128xf32>
    %cst_7 = arith.constant dense<0xFF800000> : vector<8x128xf32>
    %9 = vector.multi_reduction <maximumf>, %8, %cst_7 [1] : vector<8x8x128xf32> to vector<8x128xf32>
    %cst_8 = arith.constant 0.000000e+00 : f32
    %10 = vector.broadcast %cst_8 : f32 to vector<8x128xf32>
    %11 = arith.maximumf %9, %10 : vector<8x128xf32>
    %c0_9 = arith.constant 0 : index
    %c0_10 = arith.constant 0 : index
    %12 = vector.load %arg4[%c0_9, %c0_10] : memref<8x128xf32, #tpu.memory_space<vmem>>, vector<8x128xf32>
    tpu.vector_store %arg4[%c0_9, %c0_10], %11 {strides = array<i32>} : memref<8x128xf32, #tpu.memory_space<vmem>>, vector<8x128xf32>,
    return
  }
  func.func @transform_0(%arg0: i32) -> (i32, i32) {
    %c0_i32 = arith.constant 0 : i32
    %c0_i32_0 = arith.constant 0 : i32
    return %arg0, %c0_i32 : i32, i32
  }
  func.func @transform_1(%arg0: i32) -> (i32, i32) {
    %c0_i32 = arith.constant 0 : i32
    %c0_i32_0 = arith.constant 0 : i32
    %c0_i32_1 = arith.constant 0 : i32
    return %c0_i32, %c0_i32_0 : i32, i32
  }
  func.func @transform_2(%arg0: i32) -> (i32, i32) {
    %c0_i32 = arith.constant 0 : i32
    %c0_i32_0 = arith.constant 0 : i32
    %c0_i32_1 = arith.constant 0 : i32
    return %c0_i32, %c0_i32_0 : i32, i32
  }
  func.func @transform_3(%arg0: i32) -> (i32, i32) {
    %c0_i32 = arith.constant 0 : i32
    %c0_i32_0 = arith.constant 0 : i32
    return %arg0, %c0_i32 : i32, i32
  }
}

</mosaic_0001>

<llo_original>
// kernel: tpu_custom_call.1
$region0: #{tpu_custom_call.1}
  #allocation0 [shape = 'u32[]', space=smem, size = 0x4, offset = 0x4, fixed_abs, tag = 'smem constant byte address 0x4 - core index']
  #allocation1 [shape = 'u32[144,128]{1,0:T(1,128)}', space=vmem, size = 0x12000, scoped, tag = 'internal scratch']
  %s0 = inlined_call_operand.vmem [shape: bf16[128,8], index: 0, kind: input, shape index: {}]
  %s1 = inlined_call_operand.vmem [shape: bf16[8,17], index: 1, kind: input, shape index: {}]
  %s2 = inlined_call_operand.vmem [shape: bf16[17,128], index: 2, kind: input, shape index: {}]
  %s3 = inlined_call_operand.hbm [shape: f32[16,128], index: 3, kind: output, shape index: {}]
  %s4 = sld [smem:[#allocation0]]
  $region45: #{tpu_custom_call.1} parent=0
    _
  %s6 = ssub.s32 1, %s4
  %s7 = scalar_select 0, %s6, %s4
  $region1: #{tpu_custom_call.1} parent=0
    #allocation2 [shape = 'u8[8192]{0}', space=vmem, size = 0x2000, scoped, tag = 'output window, operand 0']
    #allocation3 [shape = 's32[2]{0}', space=sflag, size = 0x8, scoped, tag = 'scoped memory for tpu_custom_call.1']
    %8 = vsyncpa [#allocation3], 0
    %s9 = scalar_lea.sflag [#allocation3], 1
    %10 = vsyncpa %s9, 0
    loop: start=0, step=1, limit=4
    $region2: #{tpu_custom_call.1} parent=1 // loop_pre_header
      _
    $region3: #{tpu_custom_call.1} parent=1 // loop_header
      %s12 = sphi 0, %s16
      %p13 = scmp.ge.s32.totalorder %s12, 4
      %s22 = sphi 0, %s24
      %s25 = sphi 0, %s22
      %s26 = sphi 0, %s25
      %s42 = sphi 0, %s26
      %s46 = sphi 0, %s46
      %s48 = sphi 0, %s46
      %s49 = sphi 0, %s48
      %s63 = sphi 0, %s49
      %s67 = sphi 0, %s67
      %s69 = sphi 0, %s67
      %s70 = sphi 0, %s69
      %s84 = sphi 0, %s70
      %s90 = sphi 0, %s92
      %s93 = sphi 0, %s90
      %s94 = sphi 0, %s93
      %s110 = sphi 0, %s94
    $region4: #{tpu_custom_call.1} parent=1 // loop_header_branch
      %15 = sbr.rel (%p13) target = $region8
    $region5: #{tpu_custom_call.1} parent=1 // loop_body
      %s17 = ssub.s32 %s12, 1
      %s18 = ssub.s32 %s12, 2
      %s19 = sadd.s32 %s12, 1
      %s20 = ssub.s32 %s12, %s19
      %p21 = scmp.eq.s32.totalorder %s20, 0
      %s23 = sadd.s32 %s22, 1
      %s24 = scalar_select %p21, %s22, %s23
      %p27 = pneg %p21
      %p28 = scmp.eq.s32.totalorder %s12, 1
      %p29 = por %p27, %p28
      %p30 = scmp.ne.s32.totalorder %s22, %s25
      %p31 = scmp.eq.s32.totalorder %s12, 0
      %p32 = por %p30, %p31
      %p33 = scmp.ne.s32.totalorder %s22, %s25
      %p34 = scmp.eq.s32.totalorder %s17, 1
      %p35 = por %p33, %p34
      %p36 = scmp.ne.s32.totalorder %s25, %s26
      %p37 = scmp.eq.s32.totalorder %s17, 0
      %p38 = por %p36, %p37
      %p39 = scmp.ne.s32.totalorder %s25, %s26
      %p40 = scmp.eq.s32.totalorder %s18, 1
      %p41 = por %p39, %p40
      %p43 = scmp.ne.s32.totalorder %s26, %s42
      %p44 = scmp.eq.s32.totalorder %s18, 0
      %p45 = por %p43, %p44
      %s47 = sadd.s32 %s46, 1
      %p50 = scmp.eq.s32.totalorder %s12, 1
      %p51 = scmp.ne.s32.totalorder %s46, %s48
      %p52 = scmp.eq.s32.totalorder %s12, 0
      %p53 = por %p51, %p52
      %p54 = scmp.ne.s32.totalorder %s46, %s48
      %p55 = scmp.eq.s32.totalorder %s17, 1
      %p56 = por %p54, %p55
      %p57 = scmp.ne.s32.totalorder %s48, %s49
      %p58 = scmp.eq.s32.totalorder %s17, 0
      %p59 = por %p57, %p58
      %p60 = scmp.ne.s32.totalorder %s48, %s49
      %p61 = scmp.eq.s32.totalorder %s18, 1
      %p62 = por %p60, %p61
      %p64 = scmp.ne.s32.totalorder %s49, %s63
      %p65 = scmp.eq.s32.totalorder %s18, 0
      %p66 = por %p64, %p65
      %s68 = sadd.s32 %s67, 1
      %p71 = scmp.eq.s32.totalorder %s12, 1
      %p72 = scmp.ne.s32.totalorder %s67, %s69
      %p73 = scmp.eq.s32.totalorder %s12, 0
      %p74 = por %p72, %p73
      %p75 = scmp.ne.s32.totalorder %s67, %s69
      %p76 = scmp.eq.s32.totalorder %s17, 1
      %p77 = por %p75, %p76
      %p78 = scmp.ne.s32.totalorder %s69, %s70
      %p79 = scmp.eq.s32.totalorder %s17, 0
      %p80 = por %p78, %p79
      %p81 = scmp.ne.s32.totalorder %s69, %s70
      %p82 = scmp.eq.s32.totalorder %s18, 1
      %p83 = por %p81, %p82
      %p85 = scmp.ne.s32.totalorder %s70, %s84
      %p86 = scmp.eq.s32.totalorder %s18, 0
      %p87 = por %p85, %p86
      %s88 = ssub.s32 %s12, %s19
      %p89 = scmp.eq.s32.totalorder %s88, 0
      %s91 = sadd.s32 %s90, 1
      %s92 = scalar_select %p89, %s90, %s91
      %p95 = pneg %p89
      %p96 = scmp.eq.s32.totalorder %s12, 1
      %p97 = por %p95, %p96
      %p98 = scmp.ne.s32.totalorder %s90, %s93
      %p99 = scmp.eq.s32.totalorder %s12, 0
      %p100 = por %p98, %p99
      %p101 = scmp.ne.s32.totalorder %s90, %s93
      %p102 = scmp.eq.s32.totalorder %s17, 1
      %p103 = por %p101, %p102
      %p104 = scmp.ne.s32.totalorder %s93, %s94
      %p105 = scmp.eq.s32.totalorder %s17, 0
      %p106 = por %p104, %p105
      %p107 = scmp.ne.s32.totalorder %s93, %s94
      %p108 = scmp.eq.s32.totalorder %s18, 1
      %p109 = por %p107, %p108
      %p111 = scmp.ne.s32.totalorder %s94, %s110
      %p112 = scmp.eq.s32.totalorder %s18, 0
      %p113 = por %p111, %p112
      %p114 = scmp.le.s32.totalorder 1, %s12
      %p115 = scmp.lt.s32.totalorder %s12, 3
      %p116 = pnand %p114, %p115
      %p117 = pneg %p116
      // Predicated region
      $region9: #{tpu_custom_call.1} parent=5 // pred_check
        _
      $region10: #{tpu_custom_call.1} parent=5 // pred_check_branch
        %119 = sbr.rel (%p116) target = $region12
      $region11: #{tpu_custom_call.1} parent=5 // pred_region
        %s120 = ssub.s32 %s12, 1
        // Predicated region
        $region13: #{tpu_custom_call.1} parent=11 // pred_check
          %p121 = pneg %p59
        $region14: #{tpu_custom_call.1} parent=11 // pred_check_branch
          %123 = sbr.rel (%p121) target = $region16
        $region15: #{tpu_custom_call.1} parent=11 // pred_region
          _
        $region16: #{tpu_custom_call.1} parent=11 // pred_fallthru
          _
        // Predicated region
        $region17: #{tpu_custom_call.1} parent=11 // pred_check
          %p124 = pneg %p80
        $region18: #{tpu_custom_call.1} parent=11 // pred_check_branch
          %126 = sbr.rel (%p124) target = $region20
        $region19: #{tpu_custom_call.1} parent=11 // pred_region
          _
        $region20: #{tpu_custom_call.1} parent=11 // pred_fallthru
          _
      $region12: #{tpu_custom_call.1} parent=5 // pred_fallthru
        _
      %p127 = scmp.lt.s32.totalorder %s12, 2
      // Predicated region
      $region21: #{tpu_custom_call.1} parent=5 // pred_check
        %p128 = pneg %p127
      $region22: #{tpu_custom_call.1} parent=5 // pred_check_branch
        %130 = sbr.rel (%p128) target = $region24
      $region23: #{tpu_custom_call.1} parent=5 // pred_region
        // Predicated region
        $region25: #{tpu_custom_call.1} parent=23 // pred_check
          %p131 = pneg %p32
        $region26: #{tpu_custom_call.1} parent=23 // pred_check_branch
          %133 = sbr.rel (%p131) target = $region28
        $region27: #{tpu_custom_call.1} parent=23 // pred_region
          %s134 = smul.u32 8, %s12
          %p135 = scmp.lt.s32.totalorder %s134, 15
          %s136 = scalar_select %p135, %s134, 15
          %s137 = smul.addr %s136, 4
          %s138 = scalar_lea.vmem %s0, %s137
          %s139 = smul.u32 8, %s12
        $region28: #{tpu_custom_call.1} parent=23 // pred_fallthru
          _
      $region24: #{tpu_custom_call.1} parent=5 // pred_fallthru
        _
      %p140 = scmp.le.s32.totalorder 1, %s12
      %p141 = scmp.lt.s32.totalorder %s12, 3
      %p142 = pnand %p140, %p141
      %p143 = pneg %p142
      // Predicated region
      $region29: #{tpu_custom_call.1} parent=5 // pred_check
        _
      $region30: #{tpu_custom_call.1} parent=5 // pred_check_branch
        %145 = sbr.rel (%p142) target = $region32
      $region31: #{tpu_custom_call.1} parent=5 // pred_region
        %s146 = ssub.s32 %s12, 1
        %s147 = smul.u32 8, %s17
        %p148 = scmp.lt.s32.totalorder %s147, 15
        %s149 = scalar_select %p148, %s147, 15
        %s150 = smul.addr %s149, 4
        %s151 = scalar_lea.vmem %s0, %s150
        %p152 = pneg %p38
        %p153 = pneg %p35
        %p154 = pneg %p59
        %p155 = pneg %p56
        %p156 = pneg %p80
        %p157 = pneg %p77
        %p158 = pneg %p106
        %p159 = pneg %p103
        %s160 = sand.u32 %s93, 1
        %s161 = scalar_lea.sflag [#allocation3], %s160
        %s162 = sand.u32 %s93, 1
        %s163 = smul.addr %s162, 8
        %s164 = scalar_lea.vmem [#allocation2], %s163
        %s165 = smul.u32 8, %s17
        %p166 = scmp.lt.s32.totalorder %s165, 15
        %s167 = scalar_select %p166, %s165, 15
        %s168 = smul.addr %s167, 4
        %s169 = scalar_lea.vmem %s0, %s168
        %s170 = smul.u32 8, %s17
        %v172 = vld [vmem:[%s169] sm:$0xf]
        %v173 = vld [vmem:[%s169 + $0x4] sm:$0xf]
        %v174 = vld [vmem:[%s169 + $0x8] sm:$0xf]
        %v175 = vld [vmem:[%s169 + $0xc] sm:$0xf]
        %v176 = vld [vmem:[%s169 + $0x10] sm:$0xf]
        %v177 = vld [vmem:[%s169 + $0x14] sm:$0xf]
        %v178 = vld [vmem:[%s169 + $0x18] sm:$0xf]
        %v179 = vld [vmem:[%s169 + $0x1c] sm:$0xf]
        %v180 = vld [vmem:[%s1] sm:$0xf]
        %v189 = vunpack.c.l.b16 %v172
        %v190 = vunpack.c.l.b16 %v173
        %v191 = vunpack.c.l.b16 %v174
        %v192 = vunpack.c.l.b16 %v175
        %v193 = vunpack.c.l.b16 %v176
        %v194 = vunpack.c.l.b16 %v177
        %v195 = vunpack.c.l.b16 %v178
        %v196 = vunpack.c.l.b16 %v179
        %v197 = vpack.c.b16 %v190, %v189
        %v198 = vpack.c.b16 %v192, %v191
        %v199 = vpack.c.b16 %v194, %v193
        %v200 = vpack.c.b16 %v196, %v195
        %vm201 = vcmask 64512
        %v203 = vsel %vm201, %v197, 0
        %v206 = vsel %vm201, %v198, 0
        %v209 = vsel %vm201, %v199, 0
        %v212 = vsel %vm201, %v200, 0
        %vm214 = vcmask 1043456
        %v216 = vsel %vm214, %v180, 0
        %218 = vmatprep.subr.bf16.mxu0 0
        %219 = vmatpush1.bf16.msra.mxu0 0
        %220 = vmatprep.subr.bf16.mxu0 0
        %221 = vmatpush1.bf16.msra.mxu0 0
        %222 = vmatprep.subr.bf16.mxu0 0
        %223 = vmatpush1.bf16.msra.mxu0 0
        %224 = vmatprep.subr.bf16.mxu0 0
        %225 = vmatpush1.bf16.msra.mxu0 0
        %226 = vmatprep.subr.bf16.mxu0 0
        %227 = vmatpush1.bf16.msra.mxu0 0
        %228 = vmatprep.subr.bf16.mxu0 0
        %229 = vmatpush1.bf16.msra.mxu0 0
        %230 = vmatprep.subr.bf16.mxu0 0
        %231 = vmatpush1.bf16.msra.mxu0 0
        %232 = vmatprep.subr.bf16.mxu0 0
        %233 = vmatpush1.bf16.msra.mxu0 %v216
        %234 = vmatprep.subr.bf16.mxu0 0
        %235 = vmatpush2.bf16.msra.mxu0 0
        %236 = vmatprep.subr.bf16.mxu0 0
        %237 = vmatpush2.bf16.msra.mxu0 0
        %238 = vmatprep.subr.bf16.mxu0 0
        %239 = vmatpush2.bf16.msra.mxu0 0
        %240 = vmatprep.subr.bf16.mxu0 0
        %241 = vmatpush2.bf16.msra.mxu0 0
        %242 = vmatprep.subr.bf16.mxu0 0
        %243 = vmatpush2.bf16.msra.mxu0 0
        %244 = vmatprep.subr.bf16.mxu0 0
        %245 = vmatpush2.bf16.msra.mxu0 0
        %246 = vmatprep.subr.bf16.mxu0 0
        %247 = vmatpush2.bf16.msra.mxu0 0
        %248 = vmatprep.subr.bf16.mxu0 0
        %249 = vmatpush2.bf16.msra.mxu0 0
        %250 = vmatprep.mubr.bf16.mxu0 0
        %251 = vmatmul.mubr.bf16.gmra.mxu0 %v203
        %v252 = vpop.f32.mrf.mxu0
        %v253 = vadd.f32 0.0, %v252
        %v254 = vpop.f32.mrf.mxu0
        %v255 = vpop.f32.mrf.mxu0
        %v256 = vadd.f32 0.0, %v255
        %v257 = vpop.f32.mrf.mxu0
        %258 = vmatprep.mubr.bf16.mxu0 0
        %259 = vmatmul.mubr.bf16.gmra.mxu0 %v206
        %v260 = vpop.f32.mrf.mxu0
        %v261 = vadd.f32 0.0, %v260
        %v262 = vpop.f32.mrf.mxu0
        %v263 = vpop.f32.mrf.mxu0
        %v264 = vadd.f32 0.0, %v263
        %v265 = vpop.f32.mrf.mxu0
        %266 = vmatprep.mubr.bf16.mxu0 0
        %267 = vmatmul.mubr.bf16.gmra.mxu0 %v209
        %v268 = vpop.f32.mrf.mxu0
        %v269 = vadd.f32 0.0, %v268
        %v270 = vpop.f32.mrf.mxu0
        %v271 = vpop.f32.mrf.mxu0
        %v272 = vadd.f32 0.0, %v271
        %v273 = vpop.f32.mrf.mxu0
        %274 = vmatprep.mubr.bf16.mxu0 0
        %275 = vmatmul.mubr.bf16.gmra.mxu0 %v212
        %v276 = vpop.f32.mrf.mxu0
        %v277 = vadd.f32 0.0, %v276
        %v278 = vpop.f32.mrf.mxu0
        %v279 = vpop.f32.mrf.mxu0
        %v280 = vadd.f32 0.0, %v279
        %v281 = vpop.f32.mrf.mxu0
        %282 = vdwg.mxu0
        %v283 = vpack.c.bf16 %v256, %v253
        %v284 = vpack.c.bf16 %v264, %v261
        %v285 = vpack.c.bf16 %v272, %v269
        %v286 = vpack.c.bf16 %v280, %v277
        %v287 = vmax.bf16 %v283, 0
        %v288 = vmax.bf16 %v284, 0
        %v289 = vmax.bf16 %v285, 0
        %v290 = vmax.bf16 %v286, 0
        %v291 = vld [vmem:[%s2] sm:$0xf]
        %v292 = vld [vmem:[%s2 + $0x4] sm:$0xf]
        %v293 = vld [vmem:[%s2 + $0x8] sm:$0x1]
        %v297 = vunpack.c.l.b16 %v291
        %v298 = vunpack.c.l.b16 %v292
        %v299 = vunpack.c.l.b16 %v293
        %v300 = vpack.c.b16 %v298, %v297
        %v301 = vpack.c.b16 %v299, %v299
        %vm303 = vcmask 138240
        %v305 = vsel %vm303, %v287, 0
        %v308 = vsel %vm303, %v288, 0
        %v311 = vsel %vm303, %v289, 0
        %v314 = vsel %vm303, %v290, 0
        %vm316 = vcmask 1040384
        %v317 = vsel 0, 4294967295, 65535
        %v318 = vsel %vm316, %v317, 0
        %v320 = vand.u32 %v301, %v318
        %322 = vmatprep.subr.bf16.mxu0 0
        %323 = vmatpush1.bf16.msra.mxu0 0
        %324 = vmatprep.subr.bf16.mxu0 0
        %325 = vmatpush1.bf16.msra.mxu0 0
        %326 = vmatprep.subr.bf16.mxu0 0
        %327 = vmatpush1.bf16.msra.mxu0 0
        %328 = vmatprep.subr.bf16.mxu0 0
        %329 = vmatpush1.bf16.msra.mxu0 0
        %330 = vmatprep.subr.bf16.mxu0 0
        %331 = vmatpush1.bf16.msra.mxu0 0
        %332 = vmatprep.subr.bf16.mxu0 0
        %333 = vmatpush1.bf16.msra.mxu0 0
        %334 = vmatprep.subr.bf16.mxu0 0
        %335 = vmatpush1.bf16.msra.mxu0 %v320
        %336 = vmatprep.subr.bf16.mxu0 0
        %337 = vmatpush1.bf16.msra.mxu0 %v300
        %338 = vmatprep.subr.bf16.mxu0 0
        %339 = vmatpush2.bf16.msra.mxu0 0
        %340 = vmatprep.subr.bf16.mxu0 0
        %341 = vmatpush2.bf16.msra.mxu0 0
        %342 = vmatprep.subr.bf16.mxu0 0
        %343 = vmatpush2.bf16.msra.mxu0 0
        %344 = vmatprep.subr.bf16.mxu0 0
        %345 = vmatpush2.bf16.msra.mxu0 0
        %346 = vmatprep.subr.bf16.mxu0 0
        %347 = vmatpush2.bf16.msra.mxu0 0
        %348 = vmatprep.subr.bf16.mxu0 0
        %349 = vmatpush2.bf16.msra.mxu0 0
        %350 = vmatprep.subr.bf16.mxu0 0
        %351 = vmatpush2.bf16.msra.mxu0 0
        %352 = vmatprep.subr.bf16.mxu0 0
        %353 = vmatpush2.bf16.msra.mxu0 0
        %354 = vmatprep.mubr.bf16.mxu0 0
        %355 = vmatmul.mubr.bf16.gmra.mxu0 %v305
        %v356 = vpop.f32.mrf.mxu0
        %v357 = vadd.f32 0.0, %v356
        %v358 = vpop.f32.mrf.mxu0
        %v359 = vpop.f32.mrf.mxu0
        %v360 = vadd.f32 0.0, %v359
        %v361 = vpop.f32.mrf.mxu0
        %362 = vmatprep.mubr.bf16.mxu0 0
        %363 = vmatmul.mubr.bf16.gmra.mxu0 %v308
        %v364 = vpop.f32.mrf.mxu0
        %v365 = vadd.f32 0.0, %v364
        %v366 = vpop.f32.mrf.mxu0
        %v367 = vpop.f32.mrf.mxu0
        %v368 = vadd.f32 0.0, %v367
        %v369 = vpop.f32.mrf.mxu0
        %370 = vmatprep.mubr.bf16.mxu0 0
        %371 = vmatmul.mubr.bf16.gmra.mxu0 %v311
        %v372 = vpop.f32.mrf.mxu0
        %v373 = vadd.f32 0.0, %v372
        %v374 = vpop.f32.mrf.mxu0
        %v375 = vpop.f32.mrf.mxu0
        %v376 = vadd.f32 0.0, %v375
        %v377 = vpop.f32.mrf.mxu0
        %378 = vmatprep.mubr.bf16.mxu0 0
        %379 = vmatmul.mubr.bf16.gmra.mxu0 %v314
        %v380 = vpop.f32.mrf.mxu0
        %v381 = vadd.f32 0.0, %v380
        %v382 = vpop.f32.mrf.mxu0
        %v383 = vpop.f32.mrf.mxu0
        %v384 = vadd.f32 0.0, %v383
        %v385 = vpop.f32.mrf.mxu0
        %386 = vdwg.mxu0
        %v387 = vrot.slane %v357, 4
        %v388 = vmax.f32 %v357, %v387
        %v389 = vrot.slane %v388, 2
        %v390 = vmax.f32 %v388, %v389
        %v391 = vrot.slane %v390, 1
        %v392 = vmax.f32 %v390, %v391
        %v393 = vrot.slane %v360, 4
        %v394 = vmax.f32 %v360, %v393
        %v395 = vrot.slane %v394, 2
        %v396 = vmax.f32 %v394, %v395
        %v397 = vrot.slane %v396, 1
        %v398 = vmax.f32 %v396, %v397
        %v399 = vrot.slane %v365, 4
        %v400 = vmax.f32 %v365, %v399
        %v401 = vrot.slane %v400, 2
        %v402 = vmax.f32 %v400, %v401
        %v403 = vrot.slane %v402, 1
        %v404 = vmax.f32 %v402, %v403
        %v405 = vrot.slane %v368, 4
        %v406 = vmax.f32 %v368, %v405
        %v407 = vrot.slane %v406, 2
        %v408 = vmax.f32 %v406, %v407
        %v409 = vrot.slane %v408, 1
        %v410 = vmax.f32 %v408, %v409
        %v411 = vrot.slane %v373, 4
        %v412 = vmax.f32 %v373, %v411
        %v413 = vrot.slane %v412, 2
        %v414 = vmax.f32 %v412, %v413
        %v415 = vrot.slane %v414, 1
        %v416 = vmax.f32 %v414, %v415
        %v417 = vrot.slane %v376, 4
        %v418 = vmax.f32 %v376, %v417
        %v419 = vrot.slane %v418, 2
        %v420 = vmax.f32 %v418, %v419
        %v421 = vrot.slane %v420, 1
        %v422 = vmax.f32 %v420, %v421
        %v423 = vrot.slane %v381, 4
        %v424 = vmax.f32 %v381, %v423
        %v425 = vrot.slane %v424, 2
        %v426 = vmax.f32 %v424, %v425
        %v427 = vrot.slane %v426, 1
        %v428 = vmax.f32 %v426, %v427
        %v429 = vrot.slane %v384, 4
        %v430 = vmax.f32 %v384, %v429
        %v431 = vrot.slane %v430, 2
        %v432 = vmax.f32 %v430, %v431
        %v433 = vrot.slane %v432, 1
        %v434 = vmax.f32 %v432, %v433
        %v435 = vmax.f32 %v392, 0.0
        %v436 = vmax.f32 %v398, 0.0
        %v437 = vmax.f32 %v404, 0.0
        %v438 = vmax.f32 %v410, 0.0
        %v439 = vmax.f32 %v416, 0.0
        %v440 = vmax.f32 %v422, 0.0
        %v441 = vmax.f32 %v428, 0.0
        %v442 = vmax.f32 %v434, 0.0
        %vm451 = vcmask 1041409
        %v452 = vsel %vm451, %v436, %v435
        %vm453 = vcmask 1042434
        %v454 = vsel %vm453, %v437, %v452
        %vm455 = vcmask 1043459
        %v456 = vsel %vm455, %v438, %v454
        %vm457 = vcmask 1044484
        %v458 = vsel %vm457, %v439, %v456
        %vm459 = vcmask 1045509
        %v460 = vsel %vm459, %v440, %v458
        %vm461 = vcmask 1046534
        %v462 = vsel %vm461, %v441, %v460
        %vm463 = vcmask 1047559
        %v464 = vsel %vm463, %v442, %v462
        %466 = vst [vmem:[%s164] sm:$0xff] %v464
        %s467 = sand.u32 %s93, 1
        %s468 = scalar_lea.sflag [#allocation3], %s467
        %s469 = sand.u32 %s93, 1
        %s470 = smul.addr %s469, 8
        %s471 = scalar_lea.vmem [#allocation2], %s470
        // Predicated region
        $region33: #{tpu_custom_call.1} parent=31 // pred_check
          %p472 = pneg %p103
        $region34: #{tpu_custom_call.1} parent=31 // pred_check_branch
          %474 = sbr.rel (%p472) target = $region36
        $region35: #{tpu_custom_call.1} parent=31 // pred_region
          %s476 = ssub.s32 128, 128
          %477 = vsyncadd %s468, %s476
          %s478 = smul.addr %s17, 128
          %s479 = scalar_lea.hbm %s3, %s478
          %s481 = sshll.u32 %s471, 4
          %s482 = int_to_ptr.vmem [resolvable:$true] %s481
          %484 = dma.vmem_to_hbm [thread:$0]  %s482, 128, %s479, %s468
        $region36: #{tpu_custom_call.1} parent=31 // pred_fallthru
          _
      $region32: #{tpu_custom_call.1} parent=5 // pred_fallthru
        _
      %p485 = scmp.le.s32.totalorder 2, %s12
      // Predicated region
      $region37: #{tpu_custom_call.1} parent=5 // pred_check
        %p486 = pneg %p485
      $region38: #{tpu_custom_call.1} parent=5 // pred_check_branch
        %488 = sbr.rel (%p486) target = $region40
      $region39: #{tpu_custom_call.1} parent=5 // pred_region
        %s489 = ssub.s32 %s12, 2
        // Predicated region
        $region41: #{tpu_custom_call.1} parent=39 // pred_check
          %p490 = pneg %p109
        $region42: #{tpu_custom_call.1} parent=39 // pred_check_branch
          %492 = sbr.rel (%p490) target = $region44
        $region43: #{tpu_custom_call.1} parent=39 // pred_region
          %s493 = sand.u32 %s94, 1
          %s494 = scalar_lea.sflag [#allocation3], %s493
          %s495 = sand.u32 %s94, 1
          %s496 = smul.addr %s495, 8
          %s497 = scalar_lea.vmem [#allocation2], %s496
          %498 = dma.done %s494, 128
        $region44: #{tpu_custom_call.1} parent=39 // pred_fallthru
          _
      $region40: #{tpu_custom_call.1} parent=5 // pred_fallthru
        _
    $region6: #{tpu_custom_call.1} parent=1 // loop_footer
      %s16 = sadd.s32 1, %s12
    $region7: #{tpu_custom_call.1} parent=1 // loop_footer_branch
      %11 = sbr.rel target = $region3
    $region8: #{tpu_custom_call.1} parent=1 // loop_exit
      _
    %499 = vsyncpa [#allocation3], 1
    %s500 = scalar_lea.sflag [#allocation3], 1
    %501 = vsyncpa %s500, 1

// kernel: tpu_custom_call.1
$region0: #{tpu_custom_call.1}
  #allocation0 [shape = 'u32[]', space=smem, size = 0x4, offset = 0x4, fixed_abs, tag = 'smem constant byte address 0x4 - core index']
  #allocation1 [shape = 'u32[144,128]{1,0:T(1,128)}', space=vmem, size = 0x12000, scoped, tag = 'internal scratch']
  %s0 = inlined_call_operand.vmem [shape: bf16[128,8], index: 0, kind: input, shape index: {}]
  %s1 = inlined_call_operand.vmem [shape: bf16[8,17], index: 1, kind: input, shape index: {}]
  %s2 = inlined_call_operand.vmem [shape: bf16[17,128], index: 2, kind: input, shape index: {}]
  %s3 = inlined_call_operand.hbm [shape: f32[16,128], index: 3, kind: output, shape index: {}]
  %s4 = sld [smem:[#allocation0]]
  $region45: #{tpu_custom_call.1} parent=0
    _
  %s6 = ssub.s32 1, %s4
  %s7 = scalar_select 0, %s6, %s4
  $region1: #{tpu_custom_call.1} parent=0
    #allocation2 [shape = 'u8[8192]{0}', space=vmem, size = 0x2000, scoped, tag = 'output window, operand 0']
    #allocation3 [shape = 's32[2]{0}', space=sflag, size = 0x8, scoped, tag = 'scoped memory for tpu_custom_call.1']
    %8 = vsyncpa [#allocation3], 0
    %s9 = scalar_lea.sflag [#allocation3], 1
    %10 = vsyncpa %s9, 0
    loop: start=0, step=1, limit=4
    $region2: #{tpu_custom_call.1} parent=1 // loop_pre_header
      _
    $region3: #{tpu_custom_call.1} parent=1 // loop_header
      %s12 = sphi 0, %s16
      %p13 = scmp.ge.s32.totalorder %s12, 4
      %s22 = sphi 0, %s24
      %s25 = sphi 0, %s22
      %s26 = sphi 0, %s25
      %s42 = sphi 0, %s26
      %s46 = sphi 0, %s46
      %s48 = sphi 0, %s46
      %s49 = sphi 0, %s48
      %s63 = sphi 0, %s49
      %s67 = sphi 0, %s67
      %s69 = sphi 0, %s67
      %s70 = sphi 0, %s69
      %s84 = sphi 0, %s70
      %s90 = sphi 0, %s92
      %s93 = sphi 0, %s90
      %s94 = sphi 0, %s93
      %s110 = sphi 0, %s94
    $region4: #{tpu_custom_call.1} parent=1 // loop_header_branch
      %15 = sbr.rel (%p13) target = $region8
    $region5: #{tpu_custom_call.1} parent=1 // loop_body
      %s17 = ssub.s32 %s12, 1
      %s18 = ssub.s32 %s12, 2
      %s19 = sadd.s32 %s12, 1
      %s20 = ssub.s32 %s12, %s19
      %p21 = scmp.eq.s32.totalorder %s20, 0
      %s23 = sadd.s32 %s22, 1
      %s24 = scalar_select %p21, %s22, %s23
      %p27 = pneg %p21
      %p28 = scmp.eq.s32.totalorder %s12, 1
      %p29 = por %p27, %p28
      %p30 = scmp.ne.s32.totalorder %s22, %s25
      %p31 = scmp.eq.s32.totalorder %s12, 0
      %p32 = por %p30, %p31
      %p33 = scmp.ne.s32.totalorder %s22, %s25
      %p34 = scmp.eq.s32.totalorder %s17, 1
      %p35 = por %p33, %p34
      %p36 = scmp.ne.s32.totalorder %s25, %s26
      %p37 = scmp.eq.s32.totalorder %s17, 0
      %p38 = por %p36, %p37
      %p39 = scmp.ne.s32.totalorder %s25, %s26
      %p40 = scmp.eq.s32.totalorder %s18, 1
      %p41 = por %p39, %p40
      %p43 = scmp.ne.s32.totalorder %s26, %s42
      %p44 = scmp.eq.s32.totalorder %s18, 0
      %p45 = por %p43, %p44
      %s47 = sadd.s32 %s46, 1
      %p50 = scmp.eq.s32.totalorder %s12, 1
      %p51 = scmp.ne.s32.totalorder %s46, %s48
      %p52 = scmp.eq.s32.totalorder %s12, 0
      %p53 = por %p51, %p52
      %p54 = scmp.ne.s32.totalorder %s46, %s48
      %p55 = scmp.eq.s32.totalorder %s17, 1
      %p56 = por %p54, %p55
      %p57 = scmp.ne.s32.totalorder %s48, %s49
      %p58 = scmp.eq.s32.totalorder %s17, 0
      %p59 = por %p57, %p58
      %p60 = scmp.ne.s32.totalorder %s48, %s49
      %p61 = scmp.eq.s32.totalorder %s18, 1
      %p62 = por %p60, %p61
      %p64 = scmp.ne.s32.totalorder %s49, %s63
      %p65 = scmp.eq.s32.totalorder %s18, 0
      %p66 = por %p64, %p65
      %s68 = sadd.s32 %s67, 1
      %p71 = scmp.eq.s32.totalorder %s12, 1
      %p72 = scmp.ne.s32.totalorder %s67, %s69
      %p73 = scmp.eq.s32.totalorder %s12, 0
      %p74 = por %p72, %p73
      %p75 = scmp.ne.s32.totalorder %s67, %s69
      %p76 = scmp.eq.s32.totalorder %s17, 1
      %p77 = por %p75, %p76
      %p78 = scmp.ne.s32.totalorder %s69, %s70
      %p79 = scmp.eq.s32.totalorder %s17, 0
      %p80 = por %p78, %p79
      %p81 = scmp.ne.s32.totalorder %s69, %s70
      %p82 = scmp.eq.s32.totalorder %s18, 1
      %p83 = por %p81, %p82
      %p85 = scmp.ne.s32.totalorder %s70, %s84
      %p86 = scmp.eq.s32.totalorder %s18, 0
      %p87 = por %p85, %p86
      %s88 = ssub.s32 %s12, %s19
      %p89 = scmp.eq.s32.totalorder %s88, 0
      %s91 = sadd.s32 %s90, 1
      %s92 = scalar_select %p89, %s90, %s91
      %p95 = pneg %p89
      %p96 = scmp.eq.s32.totalorder %s12, 1
      %p97 = por %p95, %p96
      %p98 = scmp.ne.s32.totalorder %s90, %s93
      %p99 = scmp.eq.s32.totalorder %s12, 0
      %p100 = por %p98, %p99
      %p101 = scmp.ne.s32.totalorder %s90, %s93
      %p102 = scmp.eq.s32.totalorder %s17, 1
      %p103 = por %p101, %p102
      %p104 = scmp.ne.s32.totalorder %s93, %s94
      %p105 = scmp.eq.s32.totalorder %s17, 0
      %p106 = por %p104, %p105
      %p107 = scmp.ne.s32.totalorder %s93, %s94
      %p108 = scmp.eq.s32.totalorder %s18, 1
      %p109 = por %p107, %p108
      %p111 = scmp.ne.s32.totalorder %s94, %s110
      %p112 = scmp.eq.s32.totalorder %s18, 0
      %p113 = por %p111, %p112
      %p114 = scmp.le.s32.totalorder 1, %s12
      %p115 = scmp.lt.s32.totalorder %s12, 3
      %p116 = pnand %p114, %p115
      %p117 = pneg %p116
      // Predicated region
      $region9: #{tpu_custom_call.1} parent=5 // pred_check
        _
      $region10: #{tpu_custom_call.1} parent=5 // pred_check_branch
        %119 = sbr.rel (%p116) target = $region12
      $region11: #{tpu_custom_call.1} parent=5 // pred_region
        %s120 = ssub.s32 %s12, 1
        // Predicated region
        $region13: #{tpu_custom_call.1} parent=11 // pred_check
          %p121 = pneg %p59
        $region14: #{tpu_custom_call.1} parent=11 // pred_check_branch
          %123 = sbr.rel (%p121) target = $region16
        $region15: #{tpu_custom_call.1} parent=11 // pred_region
          _
        $region16: #{tpu_custom_call.1} parent=11 // pred_fallthru
          _
        // Predicated region
        $region17: #{tpu_custom_call.1} parent=11 // pred_check
          %p124 = pneg %p80
        $region18: #{tpu_custom_call.1} parent=11 // pred_check_branch
          %126 = sbr.rel (%p124) target = $region20
        $region19: #{tpu_custom_call.1} parent=11 // pred_region
          _
        $region20: #{tpu_custom_call.1} parent=11 // pred_fallthru
          _
      $region12: #{tpu_custom_call.1} parent=5 // pred_fallthru
        _
      %p127 = scmp.lt.s32.totalorder %s12, 2
      // Predicated region
      $region21: #{tpu_custom_call.1} parent=5 // pred_check
        %p128 = pneg %p127
      $region22: #{tpu_custom_call.1} parent=5 // pred_check_branch
        %130 = sbr.rel (%p128) target = $region24
      $region23: #{tpu_custom_call.1} parent=5 // pred_region
        // Predicated region
        $region25: #{tpu_custom_call.1} parent=23 // pred_check
          %p131 = pneg %p32
        $region26: #{tpu_custom_call.1} parent=23 // pred_check_branch
          %133 = sbr.rel (%p131) target = $region28
        $region27: #{tpu_custom_call.1} parent=23 // pred_region
          %s134 = smul.u32 8, %s12
          %p135 = scmp.lt.s32.totalorder %s134, 15
          %s136 = scalar_select %p135, %s134, 15
          %s137 = smul.addr %s136, 4
          %s138 = scalar_lea.vmem %s0, %s137
          %s139 = smul.u32 8, %s12
        $region28: #{tpu_custom_call.1} parent=23 // pred_fallthru
          _
      $region24: #{tpu_custom_call.1} parent=5 // pred_fallthru
        _
      %p140 = scmp.le.s32.totalorder 1, %s12
      %p141 = scmp.lt.s32.totalorder %s12, 3
      %p142 = pnand %p140, %p141
      %p143 = pneg %p142
      // Predicated region
      $region29: #{tpu_custom_call.1} parent=5 // pred_check
        _
      $region30: #{tpu_custom_call.1} parent=5 // pred_check_branch
        %145 = sbr.rel (%p142) target = $region32
      $region31: #{tpu_custom_call.1} parent=5 // pred_region
        %s146 = ssub.s32 %s12, 1
        %s147 = smul.u32 8, %s17
        %p148 = scmp.lt.s32.totalorder %s147, 15
        %s149 = scalar_select %p148, %s147, 15
        %s150 = smul.addr %s149, 4
        %s151 = scalar_lea.vmem %s0, %s150
        %p152 = pneg %p38
        %p153 = pneg %p35
        %p154 = pneg %p59
        %p155 = pneg %p56
        %p156 = pneg %p80
        %p157 = pneg %p77
        %p158 = pneg %p106
        %p159 = pneg %p103
        %s160 = sand.u32 %s93, 1
        %s161 = scalar_lea.sflag [#allocation3], %s160
        %s162 = sand.u32 %s93, 1
        %s163 = smul.addr %s162, 8
        %s164 = scalar_lea.vmem [#allocation2], %s163
        %s165 = smul.u32 8, %s17
        %p166 = scmp.lt.s32.totalorder %s165, 15
        %s167 = scalar_select %p166, %s165, 15
        %s168 = smul.addr %s167, 4
        %s169 = scalar_lea.vmem %s0, %s168
        %s170 = smul.u32 8, %s17
        %v172 = vld [vmem:[%s169] sm:$0xf]
        %v173 = vld [vmem:[%s169 + $0x4] sm:$0xf]
        %v174 = vld [vmem:[%s169 + $0x8] sm:$0xf]
        %v175 = vld [vmem:[%s169 + $0xc] sm:$0xf]
        %v176 = vld [vmem:[%s169 + $0x10] sm:$0xf]
        %v177 = vld [vmem:[%s169 + $0x14] sm:$0xf]
        %v178 = vld [vmem:[%s169 + $0x18] sm:$0xf]
        %v179 = vld [vmem:[%s169 + $0x1c] sm:$0xf]
        %v180 = vld [vmem:[%s1] sm:$0xf]
        %v189 = vunpack.c.l.b16 %v172
        %v190 = vunpack.c.l.b16 %v173
        %v191 = vunpack.c.l.b16 %v174
        %v192 = vunpack.c.l.b16 %v175
        %v193 = vunpack.c.l.b16 %v176
        %v194 = vunpack.c.l.b16 %v177
        %v195 = vunpack.c.l.b16 %v178
        %v196 = vunpack.c.l.b16 %v179
        %v197 = vpack.c.b16 %v190, %v189
        %v198 = vpack.c.b16 %v192, %v191
        %v199 = vpack.c.b16 %v194, %v193
        %v200 = vpack.c.b16 %v196, %v195
        %vm201 = vcmask 64512
        %v203 = vsel %vm201, %v197, 0
        %v206 = vsel %vm201, %v198, 0
        %v209 = vsel %vm201, %v199, 0
        %v212 = vsel %vm201, %v200, 0
        %vm214 = vcmask 1043456
        %v216 = vsel %vm214, %v180, 0
        %218 = vmatprep.subr.bf16.mxu0 0
        %219 = vmatpush1.bf16.msra.mxu0 0
        %220 = vmatprep.subr.bf16.mxu0 0
        %221 = vmatpush1.bf16.msra.mxu0 0
        %222 = vmatprep.subr.bf16.mxu0 0
        %223 = vmatpush1.bf16.msra.mxu0 0
        %224 = vmatprep.subr.bf16.mxu0 0
        %225 = vmatpush1.bf16.msra.mxu0 0
        %226 = vmatprep.subr.bf16.mxu0 0
        %227 = vmatpush1.bf16.msra.mxu0 0
        %228 = vmatprep.subr.bf16.mxu0 0
        %229 = vmatpush1.bf16.msra.mxu0 0
        %230 = vmatprep.subr.bf16.mxu0 0
        %231 = vmatpush1.bf16.msra.mxu0 0
        %232 = vmatprep.subr.bf16.mxu0 0
        %233 = vmatpush1.bf16.msra.mxu0 %v216
        %234 = vmatprep.subr.bf16.mxu0 0
        %235 = vmatpush2.bf16.msra.mxu0 0
        %236 = vmatprep.subr.bf16.mxu0 0
        %237 = vmatpush2.bf16.msra.mxu0 0
        %238 = vmatprep.subr.bf16.mxu0 0
        %239 = vmatpush2.bf16.msra.mxu0 0
        %240 = vmatprep.subr.bf16.mxu0 0
        %241 = vmatpush2.bf16.msra.mxu0 0
        %242 = vmatprep.subr.bf16.mxu0 0
        %243 = vmatpush2.bf16.msra.mxu0 0
        %244 = vmatprep.subr.bf16.mxu0 0
        %245 = vmatpush2.bf16.msra.mxu0 0
        %246 = vmatprep.subr.bf16.mxu0 0
        %247 = vmatpush2.bf16.msra.mxu0 0
        %248 = vmatprep.subr.bf16.mxu0 0
        %249 = vmatpush2.bf16.msra.mxu0 0
        %250 = vmatprep.mubr.bf16.mxu0 0
        %251 = vmatmul.mubr.bf16.gmra.mxu0 %v203
        %v252 = vpop.f32.mrf.mxu0
        %v253 = vadd.f32 0.0, %v252
        %v254 = vpop.f32.mrf.mxu0
        %v255 = vpop.f32.mrf.mxu0
        %v256 = vadd.f32 0.0, %v255
        %v257 = vpop.f32.mrf.mxu0
        %258 = vmatprep.mubr.bf16.mxu0 0
        %259 = vmatmul.mubr.bf16.gmra.mxu0 %v206
        %v260 = vpop.f32.mrf.mxu0
        %v261 = vadd.f32 0.0, %v260
        %v262 = vpop.f32.mrf.mxu0
        %v263 = vpop.f32.mrf.mxu0
        %v264 = vadd.f32 0.0, %v263
        %v265 = vpop.f32.mrf.mxu0
        %266 = vmatprep.mubr.bf16.mxu0 0
        %267 = vmatmul.mubr.bf16.gmra.mxu0 %v209
        %v268 = vpop.f32.mrf.mxu0
        %v269 = vadd.f32 0.0, %v268
        %v270 = vpop.f32.mrf.mxu0
        %v271 = vpop.f32.mrf.mxu0
        %v272 = vadd.f32 0.0, %v271
        %v273 = vpop.f32.mrf.mxu0
        %274 = vmatprep.mubr.bf16.mxu0 0
        %275 = vmatmul.mubr.bf16.gmra.mxu0 %v212
        %v276 = vpop.f32.mrf.mxu0
        %v277 = vadd.f32 0.0, %v276
        %v278 = vpop.f32.mrf.mxu0
        %v279 = vpop.f32.mrf.mxu0
        %v280 = vadd.f32 0.0, %v279
        %v281 = vpop.f32.mrf.mxu0
        %282 = vdwg.mxu0
        %v283 = vpack.c.bf16 %v256, %v253
        %v284 = vpack.c.bf16 %v264, %v261
        %v285 = vpack.c.bf16 %v272, %v269
        %v286 = vpack.c.bf16 %v280, %v277
        %v287 = vmax.bf16 %v283, 0
        %v288 = vmax.bf16 %v284, 0
        %v289 = vmax.bf16 %v285, 0
        %v290 = vmax.bf16 %v286, 0
        %v291 = vld [vmem:[%s2] sm:$0xf]
        %v292 = vld [vmem:[%s2 + $0x4] sm:$0xf]
        %v293 = vld [vmem:[%s2 + $0x8] sm:$0x1]
        %v297 = vunpack.c.l.b16 %v291
        %v298 = vunpack.c.l.b16 %v292
        %v299 = vunpack.c.l.b16 %v293
        %v300 = vpack.c.b16 %v298, %v297
        %v301 = vpack.c.b16 %v299, %v299
        %vm303 = vcmask 138240
        %v305 = vsel %vm303, %v287, 0
        %v308 = vsel %vm303, %v288, 0
        %v311 = vsel %vm303, %v289, 0
        %v314 = vsel %vm303, %v290, 0
        %vm316 = vcmask 1040384
        %v317 = vsel 0, 4294967295, 65535
        %v318 = vsel %vm316, %v317, 0
        %v320 = vand.u32 %v301, %v318
        %322 = vmatprep.subr.bf16.mxu0 0
        %323 = vmatpush1.bf16.msra.mxu0 0
        %324 = vmatprep.subr.bf16.mxu0 0
        %325 = vmatpush1.bf16.msra.mxu0 0
        %326 = vmatprep.subr.bf16.mxu0 0
        %327 = vmatpush1.bf16.msra.mxu0 0
        %328 = vmatprep.subr.bf16.mxu0 0
        %329 = vmatpush1.bf16.msra.mxu0 0
        %330 = vmatprep.subr.bf16.mxu0 0
        %331 = vmatpush1.bf16.msra.mxu0 0
        %332 = vmatprep.subr.bf16.mxu0 0
        %333 = vmatpush1.bf16.msra.mxu0 0
        %334 = vmatprep.subr.bf16.mxu0 0
        %335 = vmatpush1.bf16.msra.mxu0 %v320
        %336 = vmatprep.subr.bf16.mxu0 0
        %337 = vmatpush1.bf16.msra.mxu0 %v300
        %338 = vmatprep.subr.bf16.mxu0 0
        %339 = vmatpush2.bf16.msra.mxu0 0
        %340 = vmatprep.subr.bf16.mxu0 0
        %341 = vmatpush2.bf16.msra.mxu0 0
        %342 = vmatprep.subr.bf16.mxu0 0
        %343 = vmatpush2.bf16.msra.mxu0 0
        %344 = vmatprep.subr.bf16.mxu0 0
        %345 = vmatpush2.bf16.msra.mxu0 0
        %346 = vmatprep.subr.bf16.mxu0 0
        %347 = vmatpush2.bf16.msra.mxu0 0
        %348 = vmatprep.subr.bf16.mxu0 0
        %349 = vmatpush2.bf16.msra.mxu0 0
        %350 = vmatprep.subr.bf16.mxu0 0
        %351 = vmatpush2.bf16.msra.mxu0 0
        %352 = vmatprep.subr.bf16.mxu0 0
        %353 = vmatpush2.bf16.msra.mxu0 0
        %354 = vmatprep.mubr.bf16.mxu0 0
        %355 = vmatmul.mubr.bf16.gmra.mxu0 %v305
        %v356 = vpop.f32.mrf.mxu0
        %v357 = vadd.f32 0.0, %v356
        %v358 = vpop.f32.mrf.mxu0
        %v359 = vpop.f32.mrf.mxu0
        %v360 = vadd.f32 0.0, %v359
        %v361 = vpop.f32.mrf.mxu0
        %362 = vmatprep.mubr.bf16.mxu0 0
        %363 = vmatmul.mubr.bf16.gmra.mxu0 %v308
        %v364 = vpop.f32.mrf.mxu0
        %v365 = vadd.f32 0.0, %v364
        %v366 = vpop.f32.mrf.mxu0
        %v367 = vpop.f32.mrf.mxu0
        %v368 = vadd.f32 0.0, %v367
        %v369 = vpop.f32.mrf.mxu0
        %370 = vmatprep.mubr.bf16.mxu0 0
        %371 = vmatmul.mubr.bf16.gmra.mxu0 %v311
        %v372 = vpop.f32.mrf.mxu0
        %v373 = vadd.f32 0.0, %v372
        %v374 = vpop.f32.mrf.mxu0
        %v375 = vpop.f32.mrf.mxu0
        %v376 = vadd.f32 0.0, %v375
        %v377 = vpop.f32.mrf.mxu0
        %378 = vmatprep.mubr.bf16.mxu0 0
        %379 = vmatmul.mubr.bf16.gmra.mxu0 %v314
        %v380 = vpop.f32.mrf.mxu0
        %v381 = vadd.f32 0.0, %v380
        %v382 = vpop.f32.mrf.mxu0
        %v383 = vpop.f32.mrf.mxu0
        %v384 = vadd.f32 0.0, %v383
        %v385 = vpop.f32.mrf.mxu0
        %386 = vdwg.mxu0
        %v387 = vrot.slane %v357, 4
        %v388 = vmax.f32 %v357, %v387
        %v389 = vrot.slane %v388, 2
        %v390 = vmax.f32 %v388, %v389
        %v391 = vrot.slane %v390, 1
        %v392 = vmax.f32 %v390, %v391
        %v393 = vrot.slane %v360, 4
        %v394 = vmax.f32 %v360, %v393
        %v395 = vrot.slane %v394, 2
        %v396 = vmax.f32 %v394, %v395
        %v397 = vrot.slane %v396, 1
        %v398 = vmax.f32 %v396, %v397
        %v399 = vrot.slane %v365, 4
        %v400 = vmax.f32 %v365, %v399
        %v401 = vrot.slane %v400, 2
        %v402 = vmax.f32 %v400, %v401
        %v403 = vrot.slane %v402, 1
        %v404 = vmax.f32 %v402, %v403
        %v405 = vrot.slane %v368, 4
        %v406 = vmax.f32 %v368, %v405
        %v407 = vrot.slane %v406, 2
        %v408 = vmax.f32 %v406, %v407
        %v409 = vrot.slane %v408, 1
        %v410 = vmax.f32 %v408, %v409
        %v411 = vrot.slane %v373, 4
        %v412 = vmax.f32 %v373, %v411
        %v413 = vrot.slane %v412, 2
        %v414 = vmax.f32 %v412, %v413
        %v415 = vrot.slane %v414, 1
        %v416 = vmax.f32 %v414, %v415
        %v417 = vrot.slane %v376, 4
        %v418 = vmax.f32 %v376, %v417
        %v419 = vrot.slane %v418, 2
        %v420 = vmax.f32 %v418, %v419
        %v421 = vrot.slane %v420, 1
        %v422 = vmax.f32 %v420, %v421
        %v423 = vrot.slane %v381, 4
        %v424 = vmax.f32 %v381, %v423
        %v425 = vrot.slane %v424, 2
        %v426 = vmax.f32 %v424, %v425
        %v427 = vrot.slane %v426, 1
        %v428 = vmax.f32 %v426, %v427
        %v429 = vrot.slane %v384, 4
        %v430 = vmax.f32 %v384, %v429
        %v431 = vrot.slane %v430, 2
        %v432 = vmax.f32 %v430, %v431
        %v433 = vrot.slane %v432, 1
        %v434 = vmax.f32 %v432, %v433
        %v435 = vmax.f32 %v392, 0.0
        %v436 = vmax.f32 %v398, 0.0
        %v437 = vmax.f32 %v404, 0.0
        %v438 = vmax.f32 %v410, 0.0
        %v439 = vmax.f32 %v416, 0.0
        %v440 = vmax.f32 %v422, 0.0
        %v441 = vmax.f32 %v428, 0.0
        %v442 = vmax.f32 %v434, 0.0
        %vm451 = vcmask 1041409
        %v452 = vsel %vm451, %v436, %v435
        %vm453 = vcmask 1042434
        %v454 = vsel %vm453, %v437, %v452
        %vm455 = vcmask 1043459
        %v456 = vsel %vm455, %v438, %v454
        %vm457 = vcmask 1044484
        %v458 = vsel %vm457, %v439, %v456
        %vm459 = vcmask 1045509
        %v460 = vsel %vm459, %v440, %v458
        %vm461 = vcmask 1046534
        %v462 = vsel %vm461, %v441, %v460
        %vm463 = vcmask 1047559
        %v464 = vsel %vm463, %v442, %v462
        %466 = vst [vmem:[%s164] sm:$0xff] %v464
        %s467 = sand.u32 %s93, 1
        %s468 = scalar_lea.sflag [#allocation3], %s467
        %s469 = sand.u32 %s93, 1
        %s470 = smul.addr %s469, 8
        %s471 = scalar_lea.vmem [#allocation2], %s470
        // Predicated region
        $region33: #{tpu_custom_call.1} parent=31 // pred_check
          %p472 = pneg %p103
        $region34: #{tpu_custom_call.1} parent=31 // pred_check_branch
          %474 = sbr.rel (%p472) target = $region36
        $region35: #{tpu_custom_call.1} parent=31 // pred_region
          %s476 = ssub.s32 128, 128
          %477 = vsyncadd %s468, %s476
          %s478 = smul.addr %s17, 128
          %s479 = scalar_lea.hbm %s3, %s478
          %s481 = sshll.u32 %s471, 4
          %s482 = int_to_ptr.vmem [resolvable:$true] %s481
          %484 = dma.vmem_to_hbm [thread:$0]  %s482, 128, %s479, %s468
        $region36: #{tpu_custom_call.1} parent=31 // pred_fallthru
          _
      $region32: #{tpu_custom_call.1} parent=5 // pred_fallthru
        _
      %p485 = scmp.le.s32.totalorder 2, %s12
      // Predicated region
      $region37: #{tpu_custom_call.1} parent=5 // pred_check
        %p486 = pneg %p485
      $region38: #{tpu_custom_call.1} parent=5 // pred_check_branch
        %488 = sbr.rel (%p486) target = $region40
      $region39: #{tpu_custom_call.1} parent=5 // pred_region
        %s489 = ssub.s32 %s12, 2
        // Predicated region
        $region41: #{tpu_custom_call.1} parent=39 // pred_check
          %p490 = pneg %p109
        $region42: #{tpu_custom_call.1} parent=39 // pred_check_branch
          %492 = sbr.rel (%p490) target = $region44
        $region43: #{tpu_custom_call.1} parent=39 // pred_region
          %s493 = sand.u32 %s94, 1
          %s494 = scalar_lea.sflag [#allocation3], %s493
          %s495 = sand.u32 %s94, 1
          %s496 = smul.addr %s495, 8
          %s497 = scalar_lea.vmem [#allocation2], %s496
          %498 = dma.done %s494, 128
        $region44: #{tpu_custom_call.1} parent=39 // pred_fallthru
          _
      $region40: #{tpu_custom_call.1} parent=5 // pred_fallthru
        _
    $region6: #{tpu_custom_call.1} parent=1 // loop_footer
      %s16 = sadd.s32 1, %s12
    $region7: #{tpu_custom_call.1} parent=1 // loop_footer_branch
      %11 = sbr.rel target = $region3
    $region8: #{tpu_custom_call.1} parent=1 // loop_exit
      _
    %499 = vsyncpa [#allocation3], 1
    %s500 = scalar_lea.sflag [#allocation3], 1
    %501 = vsyncpa %s500, 1

</llo_original>
